<compile_context>
chip_gen: v7x
topology: tpu7x:2x2x1
jax: 0.10.0
libtpu: 0.0.40
codegen_flags: <defaults>
</compile_context>

<pallas_src>
import jax
import jax.numpy as jnp
from jax import lax
from jax.experimental import pallas as pl
from jax.experimental.pallas import tpu as pltpu


# ----------------------------- activations -----------------------------------
def _leaky_relu(x):                       # nn.LeakyReLU default negative_slope=0.01
    return jnp.where(x >= 0, x, 0.01 * x)


def _mish(x):                             # x * tanh(softplus(x)), stable softplus
    sp = jnp.maximum(x, 0.0) + jnp.log1p(jnp.exp(-jnp.abs(x)))
    return x * jnp.tanh(sp)


def _identity(x):
    return x


_ACTS = {"leaky_relu": _leaky_relu, "mish": _mish, "linear": _identity}


def _round_up(v, m):
    return ((v + m - 1) // m) * m


# ----------------------------- Pallas kernels --------------------------------
def conv_stats_kernel(p_ref, w_ref, y_ref, sum_ref, sq_ref):
    """One (image n, Cout-tile c, spatial-tile j) grid cell.

    p_ref : (ts, Kp) bf16   im2col patches (spatial rows, contraction)
    w_ref : (tc, Kp) bf16   flattened conv-weight tile
    y_ref : (tc, ts) bf16   conv output, channel-major (fused NCHW layout)
    sum_ref / sq_ref : (tc, 1) f32  per-image, per-channel partial batch stats
    """
    @pl.when(pl.program_id(2) == 0)
    def _():
        sum_ref[...] = jnp.zeros_like(sum_ref)
        sq_ref[...] = jnp.zeros_like(sq_ref)

    # y^T = W @ P^T  ->  (tc, ts); bf16 inputs on the MXU, f32 accumulate.
    yt = lax.dot_general(
        w_ref[...], p_ref[...],
        dimension_numbers=(((1,), (1,)), ((), ())),
        preferred_element_type=jnp.float32)
    y_ref[...] = yt.astype(y_ref.dtype)
    sum_ref[...] += jnp.sum(yt, axis=1, keepdims=True)
    sq_ref[...] += jnp.sum(yt * yt, axis=1, keepdims=True)


def make_bn_act_kernel(act):
    def bn_act_kernel(y_ref, scale_ref, shift_ref, o_ref):
        y = y_ref[...].astype(jnp.float32)               # (tc, ts)
        z = y * scale_ref[...] + shift_ref[...]          # broadcast (tc, 1)
        o_ref[...] = act(z).astype(o_ref.dtype)
    return bn_act_kernel


# ----------------------------- wrapper ----------------------------------------
def conv_bn_act(x, weight, gamma, beta, *, stride=1, activation="leaky_relu",
                eps=1e-5, ts=512, tc=256, compute_dtype=jnp.bfloat16,
                vmem_limit_bytes=48 * 1024 * 1024):
    """x: (N, Cin, H, W)  weight: (Cout, Cin, k, k)  gamma/beta: (Cout,) -> (N, Cout, Ho, Wo)"""
    N, Cin, H, W = x.shape
    Cout, _, k, _ = weight.shape
    pad = k // 2
    Ho = (H + 2 * pad - k) // stride + 1
    Wo = (W + 2 * pad - k) // stride + 1
    S = Ho * Wo                  # spatial positions per image
    K = Cin * k * k              # contraction length

    # ---- padded / tiled sizes: keep minor dims lane-dense (multiples of 128) ----
    Kp = _round_up(K, 128)
    Coutp = _round_up(Cout, 128)
    tc_eff = min(tc, Coutp)
    ts_eff = min(ts, _round_up(S, 128))
    Sp = _round_up(S, ts_eff)

    # ---- glue: im2col patches, NHWC order (channels on the lane axis), bf16 ----
    # TODO(synk): patch extraction is still materialized in HBM (k*k read blowup); a
    # fully fused version needs manual overlapping-window DMA (pl.ANY + make_async_copy).
    x_nhwc = jnp.transpose(x, (0, 2, 3, 1)).astype(compute_dtype)
    xp = jnp.pad(x_nhwc, ((0, 0), (pad, pad), (pad, pad), (0, 0)))
    taps = []
    for kh in range(k):
        for kw in range(k):
            taps.append(lax.slice(
                xp, (0, kh, kw, 0),
                (N, kh + (Ho - 1) * stride + 1, kw + (Wo - 1) * stride + 1, Cin),
                (1, stride, stride, 1)))                   # (N, Ho, Wo, Cin)
    pat = jnp.concatenate(taps, axis=-1)                    # (N, Ho, Wo, k*k*Cin)
    pat = pat.reshape(N, S, K)
    pat = jnp.pad(pat, ((0, 0), (0, Sp - S), (0, Kp - K)))  # zero rows/cols are inert

    # weight flattened to (Cout, K) with K ordered (kh, kw, ci) to match `pat`
    w_mat = jnp.transpose(weight, (0, 2, 3, 1)).reshape(Cout, K)
    w_mat = jnp.pad(w_mat, ((0, Coutp - Cout), (0, Kp - K))).astype(compute_dtype)

    grid = (N, Coutp // tc_eff, Sp // ts_eff)

    # ---- pass 1: conv matmul (channel-major output) + batch statistics ---------
    y_t, csum, csq = pl.pallas_call(
        conv_stats_kernel,
        out_shape=(jax.ShapeDtypeStruct((N, Coutp, Sp), compute_dtype),
                   jax.ShapeDtypeStruct((N, Coutp, 1), jnp.float32),
                   jax.ShapeDtypeStruct((N, Coutp, 1), jnp.float32)),
        grid_spec=pltpu.PrefetchScalarGridSpec(
            num_scalar_prefetch=0, grid=grid,
            in_specs=[pl.BlockSpec((None, ts_eff, Kp), lambda n, c, j: (n, j, 0)),
                      pl.BlockSpec((tc_eff, Kp), lambda n, c, j: (c, 0))],
            out_specs=(pl.BlockSpec((None, tc_eff, ts_eff), lambda n, c, j: (n, c, j)),
                       pl.BlockSpec((None, tc_eff, 1), lambda n, c, j: (n, c, 0)),
                       pl.BlockSpec((None, tc_eff, 1), lambda n, c, j: (n, c, 0)))),
        compiler_params=pltpu.CompilerParams(
            dimension_semantics=("parallel", "parallel", "arbitrary"),
            vmem_limit_bytes=vmem_limit_bytes),
    )(pat, w_mat)

    # ---- glue: fold training-mode BatchNorm (batch mean, biased var) -----------
    count = float(N * S)                       # padded rows/channels contribute zeros
    total = jnp.sum(csum, axis=0)              # (Coutp, 1)
    totsq = jnp.sum(csq, axis=0)               # (Coutp, 1)
    mean = total / count
    var = jnp.maximum(totsq / count - mean * mean, 0.0)
    gamma_p = jnp.pad(gamma.astype(jnp.float32), (0, Coutp - Cout)).reshape(Coutp, 1)
    beta_p = jnp.pad(beta.astype(jnp.float32), (0, Coutp - Cout)).reshape(Coutp, 1)
    scale = gamma_p / jnp.sqrt(var + eps)
    shift = beta_p - mean * scale

    # ---- pass 2: normalize + activation (fused element-wise, NCHW layout) ------
    out_t = pl.pallas_call(
        make_bn_act_kernel(_ACTS[activation]),
        out_shape=jax.ShapeDtypeStruct((N, Coutp, Sp), x.dtype),
        grid_spec=pltpu.PrefetchScalarGridSpec(
            num_scalar_prefetch=0, grid=grid,
            in_specs=[pl.BlockSpec((None, tc_eff, ts_eff), lambda n, c, j: (n, c, j)),
                      pl.BlockSpec((tc_eff, 1), lambda n, c, j: (c, 0)),
                      pl.BlockSpec((tc_eff, 1), lambda n, c, j: (c, 0))],
            out_specs=pl.BlockSpec((None, tc_eff, ts_eff), lambda n, c, j: (n, c, j))),
        compiler_params=pltpu.CompilerParams(
            dimension_semantics=("parallel", "parallel", "parallel"),
            vmem_limit_bytes=vmem_limit_bytes),
    )(y_t, scale, shift)

    # Output is already channel-major: just strip padding and fold spatial dims.
    return out_t[:, :Cout, :S].reshape(N, Cout, Ho, Wo)


# ----------------------------- pure-JAX reference -----------------------------
def reference(x, weight, gamma, beta, *, stride, activation, eps=1e-5):
    k = weight.shape[-1]
    p = k // 2
    y = lax.conv_general_dilated(x, weight, (stride, stride),
                                 [(p, p), (p, p)],
                                 dimension_numbers=("NCHW", "OIHW", "NCHW"))
    mean = y.mean(axis=(0, 2, 3), keepdims=True)
    var = y.var(axis=(0, 2, 3), keepdims=True)        # biased, like BN normalization
    yn = (y - mean) / jnp.sqrt(var + eps)
    yn = yn * gamma.reshape(1, -1, 1, 1) + beta.reshape(1, -1, 1, 1)
    return _ACTS[activation](yn)


# ----------------------------- demo -------------------------------------------
if __name__ == "__main__":
    key = jax.random.PRNGKey(0)
    k_x, k_w, k_g, k_b = jax.random.split(key, 4)

    N, Cin, H, W = 2, 4, 16, 16
    Cout, ksz = 8, 3

    x = jax.random.normal(k_x, (N, Cin, H, W), dtype=jnp.float32)
    weight = jax.random.normal(k_w, (Cout, Cin, ksz, ksz), dtype=jnp.float32) * 0.1
    gamma = 1.0 + 0.1 * jax.random.normal(k_g, (Cout,), dtype=jnp.float32)
    beta = 0.1 * jax.random.normal(k_b, (Cout,), dtype=jnp.float32)

    # bf16 matmul inputs + bf16 inter-pass activations -> loosen vs the f32 reference.
    ATOL = RTOL = 5e-2

    ok = True
    cases = [("leaky_relu", 1), ("mish", 1), ("linear", 1), ("leaky_relu", 2)]
    for act, stride in cases:
        out = conv_bn_act(x, weight, gamma, beta, stride=stride, activation=act)
        out = jax.block_until_ready(out)
        ref = reference(x, weight, gamma, beta, stride=stride, activation=act)
        ok = ok and bool(jnp.allclose(out, ref, atol=ATOL, rtol=RTOL))

    if ok:
        print("KERNEL_OK")
    else:
        print("MISMATCH")
</pallas_src>

<mosaic_0001>
module attributes {stable_mosaic.version = 11 : i64} {
  func.func @conv_stats_kernel(%arg0: i32, %arg1: i32, %arg2: i32, %arg3: memref<1x256x128xbf16, #tpu.memory_space<vmem>>, %arg4: memref<128x128xbf16, #tpu.memory_space<vmem>>, %arg5: memref<1x128x256xbf16, #tpu.memory_space<vmem>>, %arg6: memref<1x128x1xf32, #tpu.memory_space<vmem>>, %arg7: memref<1x128x1xf32, #tpu.memory_space<vmem>>) attributes {dimension_semantics = [#tpu.dimension_semantics<parallel>, #tpu.dimension_semantics<parallel>, #tpu.dimension_semantics<arbitrary>], iteration_bounds = array<i64: 2, 1, 1>, scalar_prefetch = 0 : i64, scratch_operands = 0 : i64, tpu.core_type = #tpu.core_type<tc>, window_params = [{transform_indices = @transform_0, window_bounds = array<i64: 1, 256, 128>}, {transform_indices = @transform_1, window_bounds = array<i64: 128, 128>}, {transform_indices = @transform_2, window_bounds = array<i64: 1, 128, 256>}, {transform_indices = @transform_3, window_bounds = array<i64: 1, 128, 1>}, {transform_indices = @transform_4, window_bounds = array<i64: 1, 128, 1>}]} {
    %c0_i32 = arith.constant 0 : i32
    %0 = arith.cmpi eq, %arg2, %c0_i32 : i32
    %1 = arith.extui %0 : i1 to i32
    %c0_i32_0 = arith.constant 0 : i32
    %2 = arith.cmpi ne, %1, %c0_i32_0 : i32
    scf.if %2 {
      %cst_22 = arith.constant 0.000000e+00 : f32
      %28 = vector.broadcast %cst_22 : f32 to vector<128x1xf32>
      %c0_23 = arith.constant 0 : index
      %c0_24 = arith.constant 0 : index
      %c0_25 = arith.constant 0 : index
      %29 = vector.load %arg6[%c0_23, %c0_24, %c0_25] : memref<1x128x1xf32, #tpu.memory_space<vmem>>, vector<1x128x1xf32>
      %30 = vector.shape_cast %29 : vector<1x128x1xf32> to vector<128x1xf32>
      %31 = vector.shape_cast %28 : vector<128x1xf32> to vector<1x128x1xf32>
      tpu.vector_store %arg6[%c0_23, %c0_24, %c0_25], %31 {strides = array<i32>} : memref<1x128x1xf32, #tpu.memory_space<vmem>>, vector<1x128x1xf32>,
      %cst_26 = arith.constant 0.000000e+00 : f32
      %32 = vector.broadcast %cst_26 : f32 to vector<128x1xf32>
      %c0_27 = arith.constant 0 : index
      %c0_28 = arith.constant 0 : index
      %c0_29 = arith.constant 0 : index
      %33 = vector.load %arg7[%c0_27, %c0_28, %c0_29] : memref<1x128x1xf32, #tpu.memory_space<vmem>>, vector<1x128x1xf32>
      %34 = vector.shape_cast %33 : vector<1x128x1xf32> to vector<128x1xf32>
      %35 = vector.shape_cast %32 : vector<128x1xf32> to vector<1x128x1xf32>
      tpu.vector_store %arg7[%c0_27, %c0_28, %c0_29], %35 {strides = array<i32>} : memref<1x128x1xf32, #tpu.memory_space<vmem>>, vector<1x128x1xf32>,
    } else {
    }
    %c0 = arith.constant 0 : index
    %c0_1 = arith.constant 0 : index
    %3 = vector.load %arg4[%c0, %c0_1] : memref<128x128xbf16, #tpu.memory_space<vmem>>, vector<128x128xbf16>
    %c0_2 = arith.constant 0 : index
    %c0_3 = arith.constant 0 : index
    %c0_4 = arith.constant 0 : index
    %4 = vector.load %arg3[%c0_2, %c0_3, %c0_4] : memref<1x256x128xbf16, #tpu.memory_space<vmem>>, vector<1x256x128xbf16>
    %5 = vector.shape_cast %4 : vector<1x256x128xbf16> to vector<256x128xbf16>
    %cst = arith.constant dense<0.000000e+00> : vector<128x256xf32>
    %6 = tpu.matmul %3, %5, %cst {dimension_numbers = #tpu.dot_dimension_numbers<[1], [1], [0], [0], [0, 0, 1, 0], [], []>} : vector<128x128xbf16>, vector<256x128xbf16>, vector<128x256xf32> -> vector<128x256xf32>
    %7 = arith.truncf %6 : vector<128x256xf32> to vector<128x256xbf16>
    %c0_5 = arith.constant 0 : index
    %c0_6 = arith.constant 0 : index
    %c0_7 = arith.constant 0 : index
    %8 = vector.load %arg5[%c0_5, %c0_6, %c0_7] : memref<1x128x256xbf16, #tpu.memory_space<vmem>>, vector<1x128x256xbf16>
    %9 = vector.shape_cast %8 : vector<1x128x256xbf16> to vector<128x256xbf16>
    %10 = vector.shape_cast %7 : vector<128x256xbf16> to vector<1x128x256xbf16>
    tpu.vector_store %arg5[%c0_5, %c0_6, %c0_7], %10 {strides = array<i32>} : memref<1x128x256xbf16, #tpu.memory_space<vmem>>, vector<1x128x256xbf16>,
    %c0_8 = arith.constant 0 : index
    %c0_9 = arith.constant 0 : index
    %c0_10 = arith.constant 0 : index
    %11 = vector.load %arg6[%c0_8, %c0_9, %c0_10] : memref<1x128x1xf32, #tpu.memory_space<vmem>>, vector<1x128x1xf32>
    %12 = vector.shape_cast %11 : vector<1x128x1xf32> to vector<128x1xf32>
    %cst_11 = arith.constant dense<0.000000e+00> : vector<128xf32>
    %13 = vector.multi_reduction <add>, %6, %cst_11 [1] : vector<128x256xf32> to vector<128xf32>
    %14 = vector.shape_cast %13 : vector<128xf32> to vector<128x1xf32>
    %15 = arith.addf %12, %14 : vector<128x1xf32>
    %c0_12 = arith.constant 0 : index
    %c0_13 = arith.constant 0 : index
    %c0_14 = arith.constant 0 : index
    %16 = vector.load %arg6[%c0_12, %c0_13, %c0_14] : memref<1x128x1xf32, #tpu.memory_space<vmem>>, vector<1x128x1xf32>
    %17 = vector.shape_cast %16 : vector<1x128x1xf32> to vector<128x1xf32>
    %18 = vector.shape_cast %15 : vector<128x1xf32> to vector<1x128x1xf32>
    tpu.vector_store %arg6[%c0_12, %c0_13, %c0_14], %18 {strides = array<i32>} : memref<1x128x1xf32, #tpu.memory_space<vmem>>, vector<1x128x1xf32>,
    %c0_15 = arith.constant 0 : index
    %c0_16 = arith.constant 0 : index
    %c0_17 = arith.constant 0 : index
    %19 = vector.load %arg7[%c0_15, %c0_16, %c0_17] : memref<1x128x1xf32, #tpu.memory_space<vmem>>, vector<1x128x1xf32>
    %20 = vector.shape_cast %19 : vector<1x128x1xf32> to vector<128x1xf32>
    %21 = arith.mulf %6, %6 : vector<128x256xf32>
    %cst_18 = arith.constant dense<0.000000e+00> : vector<128xf32>
    %22 = vector.multi_reduction <add>, %21, %cst_18 [1] : vector<128x256xf32> to vector<128xf32>
    %23 = vector.shape_cast %22 : vector<128xf32> to vector<128x1xf32>
    %24 = arith.addf %20, %23 : vector<128x1xf32>
    %c0_19 = arith.constant 0 : index
    %c0_20 = arith.constant 0 : index
    %c0_21 = arith.constant 0 : index
    %25 = vector.load %arg7[%c0_19, %c0_20, %c0_21] : memref<1x128x1xf32, #tpu.memory_space<vmem>>, vector<1x128x1xf32>
    %26 = vector.shape_cast %25 : vector<1x128x1xf32> to vector<128x1xf32>
    %27 = vector.shape_cast %24 : vector<128x1xf32> to vector<1x128x1xf32>
    tpu.vector_store %arg7[%c0_19, %c0_20, %c0_21], %27 {strides = array<i32>} : memref<1x128x1xf32, #tpu.memory_space<vmem>>, vector<1x128x1xf32>,
    return
  }
  func.func @transform_0(%arg0: i32, %arg1: i32, %arg2: i32) -> (i32, i32, i32) {
    %c0_i32 = arith.constant 0 : i32
    %c0_i32_0 = arith.constant 0 : i32
    return %arg0, %arg2, %c0_i32 : i32, i32, i32
  }
  func.func @transform_1(%arg0: i32, %arg1: i32, %arg2: i32) -> (i32, i32) {
    %c0_i32 = arith.constant 0 : i32
    %c0_i32_0 = arith.constant 0 : i32
    return %arg1, %c0_i32 : i32, i32
  }
  func.func @transform_2(%arg0: i32, %arg1: i32, %arg2: i32) -> (i32, i32, i32) {
    %c0_i32 = arith.constant 0 : i32
    return %arg0, %arg1, %arg2 : i32, i32, i32
  }
  func.func @transform_3(%arg0: i32, %arg1: i32, %arg2: i32) -> (i32, i32, i32) {
    %c0_i32 = arith.constant 0 : i32
    %c0_i32_0 = arith.constant 0 : i32
    return %arg0, %arg1, %c0_i32 : i32, i32, i32
  }
  func.func @transform_4(%arg0: i32, %arg1: i32, %arg2: i32) -> (i32, i32, i32) {
    %c0_i32 = arith.constant 0 : i32
    %c0_i32_0 = arith.constant 0 : i32
    return %arg0, %arg1, %c0_i32 : i32, i32, i32
  }
}

</mosaic_0001>

<llo_original>
// kernel: tpu_custom_call.1
$region0: #{tpu_custom_call.1}
  #allocation0 [shape = 'u32[]', space=smem, size = 0x4, offset = 0x4, fixed_abs, tag = 'smem constant byte address 0x4 - core index']
  #allocation1 [shape = 'u32[144,128]{1,0:T(1,128)}', space=vmem, size = 0x12000, scoped, tag = 'internal scratch']
  %s0 = inlined_call_operand.hbm [shape: bf16[2,256,128], index: 0, kind: input, shape index: {}]
  %s1 = inlined_call_operand.hbm [shape: bf16[128,128], index: 1, kind: input, shape index: {}]
  %s2 = inlined_call_operand.hbm [shape: bf16[2,128,256], index: 2, kind: output, shape index: {0}]
  %s3 = inlined_call_operand.vmem [shape: f32[2,128,1], index: 3, kind: output, shape index: {1}]
  %s4 = inlined_call_operand.vmem [shape: f32[2,128,1], index: 4, kind: output, shape index: {2}]
  %5 = xla_tuple %s2, %s3, %s4
  %s6 = sld [smem:[#allocation0]]
  $region69: #{tpu_custom_call.1} parent=0
    _
  %s8 = ssub.s32 1, %s6
  %s9 = scalar_select 0, %s8, %s6
  $region1: #{tpu_custom_call.1} parent=0
    #allocation2 [shape = 'u8[131072]{0}', space=vmem, size = 0x20000, scoped, tag = 'input window, operand 0']
    #allocation3 [shape = 's32[2]{0}', space=sflag, size = 0x8, scoped, tag = 'scoped memory for tpu_custom_call.1']
    #allocation4 [shape = 's32[2]{0}', space=sflag, size = 0x8, scoped, tag = 'scoped memory for tpu_custom_call.1']
    #allocation5 [shape = 'u8[32768]{0}', space=vmem, size = 0x8000, scoped, tag = 'input window, operand 1, single buffered']
    #allocation6 [shape = 's32[1]{0}', space=sflag, size = 0x4, scoped, tag = 'scoped memory for tpu_custom_call.1']
    #allocation7 [shape = 'u8[131072]{0}', space=vmem, size = 0x20000, scoped, tag = 'output window, operand 0']
    %10 = vsyncpa [#allocation3], 0
    %s11 = scalar_lea.sflag [#allocation3], 1
    %12 = vsyncpa %s11, 0
    %13 = vsyncpa [#allocation6], 0
    %14 = vsyncpa [#allocation4], 0
    %s15 = scalar_lea.sflag [#allocation4], 1
    %16 = vsyncpa %s15, 0
    loop: start=0, step=1, limit=4
    $region2: #{tpu_custom_call.1} parent=1 // loop_pre_header
      _
    $region3: #{tpu_custom_call.1} parent=1 // loop_header
      %s18 = sphi 0, %s22
      %p19 = scmp.ge.s32.totalorder %s18, 4
      %s25 = sphi 0, %s44
      %s26 = sphi 0, %s40
      %s27 = sphi 0, %s36
      %s28 = sphi 0, %s25
      %s29 = sphi 0, %s26
      %s30 = sphi 0, %s27
      %s31 = sphi 0, %s28
      %s32 = sphi 0, %s29
      %s33 = sphi 0, %s30
      %s49 = sphi 0, %s51
      %s52 = sphi 0, %s49
      %s53 = sphi 0, %s52
      %s69 = sphi 0, %s53
      %s75 = sphi 0, %s77
      %s78 = sphi 0, %s75
      %s79 = sphi 0, %s78
      %s95 = sphi 0, %s79
      %s105 = sphi 0, %s107
      %s108 = sphi 0, %s105
      %s109 = sphi 0, %s108
      %s125 = sphi 0, %s109
      %s133 = sphi 0, %s135
      %s136 = sphi 0, %s133
      %s137 = sphi 0, %s136
      %s153 = sphi 0, %s137
      %s161 = sphi 0, %s163
      %s164 = sphi 0, %s161
      %s165 = sphi 0, %s164
      %s181 = sphi 0, %s165
    $region4: #{tpu_custom_call.1} parent=1 // loop_header_branch
      %21 = sbr.rel (%p19) target = $region8
    $region5: #{tpu_custom_call.1} parent=1 // loop_body
      %s23 = ssub.s32 %s18, 1
      %s24 = ssub.s32 %s18, 2
      %s34 = sadd.s32 1, %s27
      %p35 = scmp.ge.s32.totalorder %s34, 1
      %s36 = scalar_select %p35, 0, %s34
      %s37 = sadd.s32 1, %s26
      %s38 = scalar_select %p35, %s37, %s26
      %p39 = scmp.ge.s32.totalorder %s38, 1
      %s40 = scalar_select %p39, 0, %s38
      %s41 = sadd.s32 1, %s25
      %s42 = scalar_select %p39, %s41, %s25
      %p43 = scmp.ge.s32.totalorder %s42, 2
      %s44 = scalar_select %p43, 0, %s42
      %s45 = ssub.s32 %s25, %s44
      %s46 = ssub.s32 %s27, %s36
      %s47 = sor.u32 %s45, %s46
      %p48 = scmp.eq.s32.totalorder %s47, 0
      %s50 = sadd.s32 %s49, 1
      %s51 = scalar_select %p48, %s49, %s50
      %p54 = pneg %p48
      %p55 = scmp.eq.s32.totalorder %s18, 1
      %p56 = por %p54, %p55
      %p57 = scmp.ne.s32.totalorder %s49, %s52
      %p58 = scmp.eq.s32.totalorder %s18, 0
      %p59 = por %p57, %p58
      %p60 = scmp.ne.s32.totalorder %s49, %s52
      %p61 = scmp.eq.s32.totalorder %s23, 1
      %p62 = por %p60, %p61
      %p63 = scmp.ne.s32.totalorder %s52, %s53
      %p64 = scmp.eq.s32.totalorder %s23, 0
      %p65 = por %p63, %p64
      %p66 = scmp.ne.s32.totalorder %s52, %s53
      %p67 = scmp.eq.s32.totalorder %s24, 1
      %p68 = por %p66, %p67
      %p70 = scmp.ne.s32.totalorder %s53, %s69
      %p71 = scmp.eq.s32.totalorder %s24, 0
      %p72 = por %p70, %p71
      %s73 = ssub.s32 %s26, %s40
      %p74 = scmp.eq.s32.totalorder %s73, 0
      %s76 = sadd.s32 %s75, 1
      %s77 = scalar_select %p74, %s75, %s76
      %p80 = pneg %p74
      %p81 = scmp.eq.s32.totalorder %s18, 1
      %p82 = por %p80, %p81
      %p83 = scmp.ne.s32.totalorder %s75, %s78
      %p84 = scmp.eq.s32.totalorder %s18, 0
      %p85 = por %p83, %p84
      %p86 = scmp.ne.s32.totalorder %s75, %s78
      %p87 = scmp.eq.s32.totalorder %s23, 1
      %p88 = por %p86, %p87
      %p89 = scmp.ne.s32.totalorder %s78, %s79
      %p90 = scmp.eq.s32.totalorder %s23, 0
      %p91 = por %p89, %p90
      %p92 = scmp.ne.s32.totalorder %s78, %s79
      %p93 = scmp.eq.s32.totalorder %s24, 1
      %p94 = por %p92, %p93
      %p96 = scmp.ne.s32.totalorder %s79, %s95
      %p97 = scmp.eq.s32.totalorder %s24, 0
      %p98 = por %p96, %p97
      %s99 = ssub.s32 %s25, %s44
      %s100 = ssub.s32 %s26, %s40
      %s101 = sor.u32 %s99, %s100
      %s102 = ssub.s32 %s27, %s36
      %s103 = sor.u32 %s101, %s102
      %p104 = scmp.eq.s32.totalorder %s103, 0
      %s106 = sadd.s32 %s105, 1
      %s107 = scalar_select %p104, %s105, %s106
      %p110 = pneg %p104
      %p111 = scmp.eq.s32.totalorder %s18, 1
      %p112 = por %p110, %p111
      %p113 = scmp.ne.s32.totalorder %s105, %s108
      %p114 = scmp.eq.s32.totalorder %s18, 0
      %p115 = por %p113, %p114
      %p116 = scmp.ne.s32.totalorder %s105, %s108
      %p117 = scmp.eq.s32.totalorder %s23, 1
      %p118 = por %p116, %p117
      %p119 = scmp.ne.s32.totalorder %s108, %s109
      %p120 = scmp.eq.s32.totalorder %s23, 0
      %p121 = por %p119, %p120
      %p122 = scmp.ne.s32.totalorder %s108, %s109
      %p123 = scmp.eq.s32.totalorder %s24, 1
      %p124 = por %p122, %p123
      %p126 = scmp.ne.s32.totalorder %s109, %s125
      %p127 = scmp.eq.s32.totalorder %s24, 0
      %p128 = por %p126, %p127
      %s129 = ssub.s32 %s25, %s44
      %s130 = ssub.s32 %s26, %s40
      %s131 = sor.u32 %s129, %s130
      %p132 = scmp.eq.s32.totalorder %s131, 0
      %s134 = sadd.s32 %s133, 1
      %s135 = scalar_select %p132, %s133, %s134
      %p138 = pneg %p132
      %p139 = scmp.eq.s32.totalorder %s18, 1
      %p140 = por %p138, %p139
      %p141 = scmp.ne.s32.totalorder %s133, %s136
      %p142 = scmp.eq.s32.totalorder %s18, 0
      %p143 = por %p141, %p142
      %p144 = scmp.ne.s32.totalorder %s133, %s136
      %p145 = scmp.eq.s32.totalorder %s23, 1
      %p146 = por %p144, %p145
      %p147 = scmp.ne.s32.totalorder %s136, %s137
      %p148 = scmp.eq.s32.totalorder %s23, 0
      %p149 = por %p147, %p148
      %p150 = scmp.ne.s32.totalorder %s136, %s137
      %p151 = scmp.eq.s32.totalorder %s24, 1
      %p152 = por %p150, %p151
      %p154 = scmp.ne.s32.totalorder %s137, %s153
      %p155 = scmp.eq.s32.totalorder %s24, 0
      %p156 = por %p154, %p155
      %s157 = ssub.s32 %s25, %s44
      %s158 = ssub.s32 %s26, %s40
      %s159 = sor.u32 %s157, %s158
      %p160 = scmp.eq.s32.totalorder %s159, 0
      %s162 = sadd.s32 %s161, 1
      %s163 = scalar_select %p160, %s161, %s162
      %p166 = pneg %p160
      %p167 = scmp.eq.s32.totalorder %s18, 1
      %p168 = por %p166, %p167
      %p169 = scmp.ne.s32.totalorder %s161, %s164
      %p170 = scmp.eq.s32.totalorder %s18, 0
      %p171 = por %p169, %p170
      %p172 = scmp.ne.s32.totalorder %s161, %s164
      %p173 = scmp.eq.s32.totalorder %s23, 1
      %p174 = por %p172, %p173
      %p175 = scmp.ne.s32.totalorder %s164, %s165
      %p176 = scmp.eq.s32.totalorder %s23, 0
      %p177 = por %p175, %p176
      %p178 = scmp.ne.s32.totalorder %s164, %s165
      %p179 = scmp.eq.s32.totalorder %s24, 1
      %p180 = por %p178, %p179
      %p182 = scmp.ne.s32.totalorder %s165, %s181
      %p183 = scmp.eq.s32.totalorder %s24, 0
      %p184 = por %p182, %p183
      %p185 = scmp.le.s32.totalorder 1, %s18
      %p186 = scmp.lt.s32.totalorder %s18, 3
      %p187 = pnand %p185, %p186
      %p188 = pneg %p187
      // Predicated region
      $region9: #{tpu_custom_call.1} parent=5 // pred_check
        _
      $region10: #{tpu_custom_call.1} parent=5 // pred_check_branch
        %190 = sbr.rel (%p187) target = $region12
      $region11: #{tpu_custom_call.1} parent=5 // pred_region
        %s191 = ssub.s32 %s18, 1
        // Predicated region
        $region13: #{tpu_custom_call.1} parent=11 // pred_check
          %p192 = pneg %p91
        $region14: #{tpu_custom_call.1} parent=11 // pred_check_branch
          %194 = sbr.rel (%p192) target = $region16
        $region15: #{tpu_custom_call.1} parent=11 // pred_region
          %s195 = smul.u32 16, %s29
          %s197 = ssub.s32 1024, 1024
          %198 = vsyncadd [#allocation6], %s197
          %s199 = smul.addr %s195, 64
          %s200 = scalar_lea.hbm %s1, %s199
          %s201 = sshll.u32 [#allocation5], 4
          %s202 = int_to_ptr.vmem [resolvable:$true] %s201
          %207 = dma.hbm_to_vmem [thread:$0]  %s200, 1024, %s202, [#allocation6], 64, 64, 4
        $region16: #{tpu_custom_call.1} parent=11 // pred_fallthru
          _
      $region12: #{tpu_custom_call.1} parent=5 // pred_fallthru
        _
      %p208 = scmp.lt.s32.totalorder %s18, 2
      // Predicated region
      $region17: #{tpu_custom_call.1} parent=5 // pred_check
        %p209 = pneg %p208
      $region18: #{tpu_custom_call.1} parent=5 // pred_check_branch
        %211 = sbr.rel (%p209) target = $region20
      $region19: #{tpu_custom_call.1} parent=5 // pred_region
        // Predicated region
        $region21: #{tpu_custom_call.1} parent=19 // pred_check
          %p212 = pneg %p59
        $region22: #{tpu_custom_call.1} parent=19 // pred_check_branch
          %214 = sbr.rel (%p212) target = $region24
        $region23: #{tpu_custom_call.1} parent=19 // pred_region
          %s215 = sand.u32 %s49, 1
          %s216 = scalar_lea.sflag [#allocation3], %s215
          %s217 = sand.u32 %s49, 1
          %s218 = smul.addr %s217, 128
          %s219 = scalar_lea.vmem [#allocation2], %s218
          %s220 = smul.u32 32, %s27
          %s222 = ssub.s32 2048, 2048
          %223 = vsyncadd %s216, %s222
          %s224 = smul.addr %s25, 32
          %s225 = sadd.s32 %s220, %s224
          %s226 = smul.addr %s225, 64
          %s227 = scalar_lea.hbm %s0, %s226
          %s228 = sshll.u32 %s219, 4
          %s229 = int_to_ptr.vmem [resolvable:$true] %s228
          %234 = dma.hbm_to_vmem [thread:$0]  %s227, 2048, %s229, %s216, 64, 64, 4
        $region24: #{tpu_custom_call.1} parent=19 // pred_fallthru
          _
      $region20: #{tpu_custom_call.1} parent=5 // pred_fallthru
        _
      %p235 = scmp.le.s32.totalorder 1, %s18
      %p236 = scmp.lt.s32.totalorder %s18, 3
      %p237 = pnand %p235, %p236
      %p238 = pneg %p237
      // Predicated region
      $region25: #{tpu_custom_call.1} parent=5 // pred_check
        _
      $region26: #{tpu_custom_call.1} parent=5 // pred_check_branch
        %240 = sbr.rel (%p237) target = $region28
      $region27: #{tpu_custom_call.1} parent=5 // pred_region
        %s241 = ssub.s32 %s18, 1
        %s242 = sand.u32 %s52, 1
        %s243 = scalar_lea.sflag [#allocation3], %s242
        %s244 = sand.u32 %s52, 1
        %s245 = smul.addr %s244, 128
        %s246 = scalar_lea.vmem [#allocation2], %s245
        // Predicated region
        $region29: #{tpu_custom_call.1} parent=27 // pred_check
          %p247 = pneg %p65
        $region30: #{tpu_custom_call.1} parent=27 // pred_check_branch
          %249 = sbr.rel (%p247) target = $region32
        $region31: #{tpu_custom_call.1} parent=27 // pred_region
          %250 = dma.done %s243, 2048
        $region32: #{tpu_custom_call.1} parent=27 // pred_fallthru
          _
        // Predicated region
        $region33: #{tpu_custom_call.1} parent=27 // pred_check
          %p251 = pneg %p91
        $region34: #{tpu_custom_call.1} parent=27 // pred_check_branch
          %253 = sbr.rel (%p251) target = $region36
        $region35: #{tpu_custom_call.1} parent=27 // pred_region
          %254 = dma.done [#allocation6], 1024
        $region36: #{tpu_custom_call.1} parent=27 // pred_fallthru
          _
        %s255 = sand.u32 %s52, 1
        %s256 = scalar_lea.sflag [#allocation3], %s255
        %s257 = sand.u32 %s52, 1
        %s258 = smul.addr %s257, 128
        %s259 = scalar_lea.vmem [#allocation2], %s258
        %p260 = pneg %p65
        %p261 = pneg %p62
        %p262 = pneg %p91
        %p263 = pneg %p88
        %p264 = pneg %p121
        %p265 = pneg %p118
        %s266 = sand.u32 %s108, 1
        %s267 = scalar_lea.sflag [#allocation4], %s266
        %s268 = sand.u32 %s108, 1
        %s269 = smul.addr %s268, 128
        %s270 = scalar_lea.vmem [#allocation7], %s269
        %p271 = pneg %p149
        %p272 = pneg %p146
        %s273 = smul.u32 16, %s29
        %p274 = scmp.lt.s32.totalorder %s28, 1
        %s275 = scalar_select %p274, %s28, 1
        %p276 = scmp.lt.s32.totalorder %s273, 15
        %s277 = scalar_select %p276, %s273, 15
        %s278 = smul.addr %s275, 16
        %s279 = sadd.s32 %s277, %s278
        %s280 = smul.addr %s279, 8
        %s281 = scalar_lea.vmem %s3, %s280
        %p282 = pneg %p177
        %p283 = pneg %p174
        %s284 = smul.u32 16, %s29
        %p285 = scmp.lt.s32.totalorder %s28, 1
        %s286 = scalar_select %p285, %s28, 1
        %p287 = scmp.lt.s32.totalorder %s284, 15
        %s288 = scalar_select %p287, %s284, 15
        %s289 = smul.addr %s286, 16
        %s290 = sadd.s32 %s288, %s289
        %s291 = smul.addr %s290, 8
        %s292 = scalar_lea.vmem %s4, %s291
        %s293 = smul.u32 32, %s30
        %s294 = smul.u32 16, %s29
        %s295 = smul.u32 16, %s29
        %s296 = smul.u32 2, %s30
        %s297 = smul.u32 16, %s29
        %p298 = scmp.lt.s32.totalorder %s28, 1
        %s299 = scalar_select %p298, %s28, 1
        %p300 = scmp.lt.s32.totalorder %s297, 15
        %s301 = scalar_select %p300, %s297, 15
        %s302 = smul.addr %s299, 16
        %s303 = sadd.s32 %s301, %s302
        %s304 = smul.addr %s303, 8
        %s305 = scalar_lea.vmem %s3, %s304
        %s306 = smul.u32 16, %s29
        %s307 = smul.u32 16, %s29
        %p308 = scmp.lt.s32.totalorder %s28, 1
        %s309 = scalar_select %p308, %s28, 1
        %p310 = scmp.lt.s32.totalorder %s307, 15
        %s311 = scalar_select %p310, %s307, 15
        %s312 = smul.addr %s309, 16
        %s313 = sadd.s32 %s311, %s312
        %s314 = smul.addr %s313, 8
        %s315 = scalar_lea.vmem %s4, %s314
        %s316 = smul.u32 16, %s29
        %p318 = scmp.eq.s32.totalorder %s30, 0
        // Predicated region
        $region37: #{tpu_custom_call.1} parent=27 // pred_check
          %p319 = pneg %p318
        $region38: #{tpu_custom_call.1} parent=27 // pred_check_branch
          %321 = sbr.rel (%p319) target = $region40
        $region39: #{tpu_custom_call.1} parent=27 // pred_region
          %vm322 = vcmask 7168
          %323 = vst.msk [vmem:[%s305] sm:$0xff] %vm322, 0.0
          %324 = vst.msk [vmem:[%s305 + $0x8] sm:$0xff] %vm322, 0.0
          %325 = vst.msk [vmem:[%s305 + $0x10] sm:$0xff] %vm322, 0.0
          %326 = vst.msk [vmem:[%s305 + $0x18] sm:$0xff] %vm322, 0.0
          %327 = vst.msk [vmem:[%s305 + $0x20] sm:$0xff] %vm322, 0.0
          %328 = vst.msk [vmem:[%s305 + $0x28] sm:$0xff] %vm322, 0.0
          %329 = vst.msk [vmem:[%s305 + $0x30] sm:$0xff] %vm322, 0.0
          %330 = vst.msk [vmem:[%s305 + $0x38] sm:$0xff] %vm322, 0.0
          %331 = vst.msk [vmem:[%s305 + $0x40] sm:$0xff] %vm322, 0.0
          %332 = vst.msk [vmem:[%s305 + $0x48] sm:$0xff] %vm322, 0.0
          %333 = vst.msk [vmem:[%s305 + $0x50] sm:$0xff] %vm322, 0.0
          %334 = vst.msk [vmem:[%s305 + $0x58] sm:$0xff] %vm322, 0.0
          %335 = vst.msk [vmem:[%s305 + $0x60] sm:$0xff] %vm322, 0.0
          %336 = vst.msk [vmem:[%s305 + $0x68] sm:$0xff] %vm322, 0.0
          %337 = vst.msk [vmem:[%s305 + $0x70] sm:$0xff] %vm322, 0.0
          %338 = vst.msk [vmem:[%s305 + $0x78] sm:$0xff] %vm322, 0.0
          %339 = vst.msk [vmem:[%s315] sm:$0xff] %vm322, 0.0
          %340 = vst.msk [vmem:[%s315 + $0x8] sm:$0xff] %vm322, 0.0
          %341 = vst.msk [vmem:[%s315 + $0x10] sm:$0xff] %vm322, 0.0
          %342 = vst.msk [vmem:[%s315 + $0x18] sm:$0xff] %vm322, 0.0
          %343 = vst.msk [vmem:[%s315 + $0x20] sm:$0xff] %vm322, 0.0
          %344 = vst.msk [vmem:[%s315 + $0x28] sm:$0xff] %vm322, 0.0
          %345 = vst.msk [vmem:[%s315 + $0x30] sm:$0xff] %vm322, 0.0
          %346 = vst.msk [vmem:[%s315 + $0x38] sm:$0xff] %vm322, 0.0
          %347 = vst.msk [vmem:[%s315 + $0x40] sm:$0xff] %vm322, 0.0
          %348 = vst.msk [vmem:[%s315 + $0x48] sm:$0xff] %vm322, 0.0
          %349 = vst.msk [vmem:[%s315 + $0x50] sm:$0xff] %vm322, 0.0
          %350 = vst.msk [vmem:[%s315 + $0x58] sm:$0xff] %vm322, 0.0
          %351 = vst.msk [vmem:[%s315 + $0x60] sm:$0xff] %vm322, 0.0
          %352 = vst.msk [vmem:[%s315 + $0x68] sm:$0xff] %vm322, 0.0
          %353 = vst.msk [vmem:[%s315 + $0x70] sm:$0xff] %vm322, 0.0
          %354 = vst.msk [vmem:[%s315 + $0x78] sm:$0xff] %vm322, 0.0
        $region40: #{tpu_custom_call.1} parent=27 // pred_fallthru
          _
        %v355 = vld [vmem:[#allocation5] sm:$0xf]
        %v356 = vld [vmem:[#allocation5 + $0x4] sm:$0xf]
        %v357 = vld [vmem:[#allocation5 + $0x8] sm:$0xf]
        %v358 = vld [vmem:[#allocation5 + $0xc] sm:$0xf]
        %v359 = vld [vmem:[#allocation5 + $0x10] sm:$0xf]
        %v360 = vld [vmem:[#allocation5 + $0x14] sm:$0xf]
        %v361 = vld [vmem:[#allocation5 + $0x18] sm:$0xf]
        %v362 = vld [vmem:[#allocation5 + $0x1c] sm:$0xf]
        %v363 = vld [vmem:[#allocation5 + $0x20] sm:$0xf]
        %v364 = vld [vmem:[#allocation5 + $0x24] sm:$0xf]
        %v365 = vld [vmem:[#allocation5 + $0x28] sm:$0xf]
        %v366 = vld [vmem:[#allocation5 + $0x2c] sm:$0xf]
        %v367 = vld [vmem:[#allocation5 + $0x30] sm:$0xf]
        %v368 = vld [vmem:[#allocation5 + $0x34] sm:$0xf]
        %v369 = vld [vmem:[#allocation5 + $0x38] sm:$0xf]
        %v370 = vld [vmem:[#allocation5 + $0x3c] sm:$0xf]
        %v371 = vld [vmem:[%s246] sm:$0xf]
        %v372 = vld [vmem:[%s246 + $0x4] sm:$0xf]
        %v373 = vld [vmem:[%s246 + $0x8] sm:$0xf]
        %v374 = vld [vmem:[%s246 + $0xc] sm:$0xf]
        %v375 = vld [vmem:[%s246 + $0x10] sm:$0xf]
        %v376 = vld [vmem:[%s246 + $0x14] sm:$0xf]
        %v377 = vld [vmem:[%s246 + $0x18] sm:$0xf]
        %v378 = vld [vmem:[%s246 + $0x1c] sm:$0xf]
        %v379 = vld [vmem:[%s246 + $0x20] sm:$0xf]
        %v380 = vld [vmem:[%s246 + $0x24] sm:$0xf]
        %v381 = vld [vmem:[%s246 + $0x28] sm:$0xf]
        %v382 = vld [vmem:[%s246 + $0x2c] sm:$0xf]
        %v383 = vld [vmem:[%s246 + $0x30] sm:$0xf]
        %v384 = vld [vmem:[%s246 + $0x34] sm:$0xf]
        %v385 = vld [vmem:[%s246 + $0x38] sm:$0xf]
        %v386 = vld [vmem:[%s246 + $0x3c] sm:$0xf]
        %v387 = vld [vmem:[%s246 + $0x40] sm:$0xf]
        %v388 = vld [vmem:[%s246 + $0x44] sm:$0xf]
        %v389 = vld [vmem:[%s246 + $0x48] sm:$0xf]
        %v390 = vld [vmem:[%s246 + $0x4c] sm:$0xf]
        %v391 = vld [vmem:[%s246 + $0x50] sm:$0xf]
        %v392 = vld [vmem:[%s246 + $0x54] sm:$0xf]
        %v393 = vld [vmem:[%s246 + $0x58] sm:$0xf]
        %v394 = vld [vmem:[%s246 + $0x5c] sm:$0xf]
        %v395 = vld [vmem:[%s246 + $0x60] sm:$0xf]
        %v396 = vld [vmem:[%s246 + $0x64] sm:$0xf]
        %v397 = vld [vmem:[%s246 + $0x68] sm:$0xf]
        %v398 = vld [vmem:[%s246 + $0x6c] sm:$0xf]
        %v399 = vld [vmem:[%s246 + $0x70] sm:$0xf]
        %v400 = vld [vmem:[%s246 + $0x74] sm:$0xf]
        %v401 = vld [vmem:[%s246 + $0x78] sm:$0xf]
        %v402 = vld [vmem:[%s246 + $0x7c] sm:$0xf]
        %v419 = vunpack.c.l.b16 %v355
        %v420 = vunpack.c.l.b16 %v356
        %v421 = vunpack.c.l.b16 %v357
        %v422 = vunpack.c.l.b16 %v358
        %v423 = vunpack.c.l.b16 %v359
        %v424 = vunpack.c.l.b16 %v360
        %v425 = vunpack.c.l.b16 %v361
        %v426 = vunpack.c.l.b16 %v362
        %v427 = vunpack.c.l.b16 %v363
        %v428 = vunpack.c.l.b16 %v364
        %v429 = vunpack.c.l.b16 %v365
        %v430 = vunpack.c.l.b16 %v366
        %v431 = vunpack.c.l.b16 %v367
        %v432 = vunpack.c.l.b16 %v368
        %v433 = vunpack.c.l.b16 %v369
        %v434 = vunpack.c.l.b16 %v370
        %v435 = vpack.c.b16 %v420, %v419
        %v436 = vpack.c.b16 %v422, %v421
        %v437 = vpack.c.b16 %v424, %v423
        %v438 = vpack.c.b16 %v426, %v425
        %v439 = vpack.c.b16 %v428, %v427
        %v440 = vpack.c.b16 %v430, %v429
        %v441 = vpack.c.b16 %v432, %v431
        %v442 = vpack.c.b16 %v434, %v433
        %v483 = vunpack.c.l.b16 %v371
        %v484 = vunpack.c.l.b16 %v372
        %v485 = vunpack.c.l.b16 %v373
        %v486 = vunpack.c.l.b16 %v374
        %v487 = vunpack.c.l.b16 %v375
        %v488 = vunpack.c.l.b16 %v376
        %v489 = vunpack.c.l.b16 %v377
        %v490 = vunpack.c.l.b16 %v378
        %v491 = vunpack.c.l.b16 %v379
        %v492 = vunpack.c.l.b16 %v380
        %v493 = vunpack.c.l.b16 %v381
        %v494 = vunpack.c.l.b16 %v382
        %v495 = vunpack.c.l.b16 %v383
        %v496 = vunpack.c.l.b16 %v384
        %v497 = vunpack.c.l.b16 %v385
        %v498 = vunpack.c.l.b16 %v386
        %v499 = vunpack.c.l.b16 %v387
        %v500 = vunpack.c.l.b16 %v388
        %v501 = vunpack.c.l.b16 %v389
        %v502 = vunpack.c.l.b16 %v390
        %v503 = vunpack.c.l.b16 %v391
        %v504 = vunpack.c.l.b16 %v392
        %v505 = vunpack.c.l.b16 %v393
        %v506 = vunpack.c.l.b16 %v394
        %v507 = vunpack.c.l.b16 %v395
        %v508 = vunpack.c.l.b16 %v396
        %v509 = vunpack.c.l.b16 %v397
        %v510 = vunpack.c.l.b16 %v398
        %v511 = vunpack.c.l.b16 %v399
        %v512 = vunpack.c.l.b16 %v400
        %v513 = vunpack.c.l.b16 %v401
        %v514 = vunpack.c.l.b16 %v402
        %v515 = vpack.c.b16 %v484, %v483
        %v516 = vpack.c.b16 %v486, %v485
        %v517 = vpack.c.b16 %v488, %v487
        %v518 = vpack.c.b16 %v490, %v489
        %v519 = vpack.c.b16 %v492, %v491
        %v520 = vpack.c.b16 %v494, %v493
        %v521 = vpack.c.b16 %v496, %v495
        %v522 = vpack.c.b16 %v498, %v497
        %v523 = vpack.c.b16 %v500, %v499
        %v524 = vpack.c.b16 %v502, %v501
        %v525 = vpack.c.b16 %v504, %v503
        %v526 = vpack.c.b16 %v506, %v505
        %v527 = vpack.c.b16 %v508, %v507
        %v528 = vpack.c.b16 %v510, %v509
        %v529 = vpack.c.b16 %v512, %v511
        %v530 = vpack.c.b16 %v514, %v513
        %547 = vmatprep.subr.bf16.mxu0 0
        %548 = vmatpush1.bf16.xpose.msra.mxu0 %v515
        %549 = vmatprep.subr.bf16.mxu0 0
        %550 = vmatpush1.bf16.xpose.msra.mxu0 %v516
        %551 = vmatprep.subr.bf16.mxu0 0
        %552 = vmatpush1.bf16.xpose.msra.mxu0 %v517
        %553 = vmatprep.subr.bf16.mxu0 0
        %554 = vmatpush1.bf16.xpose.msra.mxu0 %v518
        %555 = vmatprep.subr.bf16.mxu0 0
        %556 = vmatpush1.bf16.xpose.msra.mxu0 %v519
        %557 = vmatprep.subr.bf16.mxu0 0
        %558 = vmatpush1.bf16.xpose.msra.mxu0 %v520
        %559 = vmatprep.subr.bf16.mxu0 0
        %560 = vmatpush1.bf16.xpose.msra.mxu0 %v521
        %561 = vmatprep.subr.bf16.mxu0 0
        %562 = vmatpush1.bf16.xpose.msra.mxu0 %v522
        %563 = vmatprep.subr.bf16.mxu0 0
        %564 = vmatpush1.bf16.xpose.msra.mxu0 %v523
        %565 = vmatprep.subr.bf16.mxu0 0
        %566 = vmatpush1.bf16.xpose.msra.mxu0 %v524
        %567 = vmatprep.subr.bf16.mxu0 0
        %568 = vmatpush1.bf16.xpose.msra.mxu0 %v525
        %569 = vmatprep.subr.bf16.mxu0 0
        %570 = vmatpush1.bf16.xpose.msra.mxu0 %v526
        %571 = vmatprep.subr.bf16.mxu0 0
        %572 = vmatpush1.bf16.xpose.msra.mxu0 %v527
        %573 = vmatprep.subr.bf16.mxu0 0
        %574 = vmatpush1.bf16.xpose.msra.mxu0 %v528
        %575 = vmatprep.subr.bf16.mxu0 0
        %576 = vmatpush1.bf16.xpose.msra.mxu0 %v529
        %577 = vmatprep.subr.bf16.mxu0 0
        %578 = vmatpush1.bf16.xpose.msra.mxu0 %v530
        %579 = vmatprep.mubr.bf16.mxu0 0
        %580 = vmatmul.mubr.bf16.gmra.mrb[0].mxu0 %v435
        %v581 = vpop.f32.mrb[0].mxu0
        %v582 = vadd.f32 0.0, %v581
        %v583 = vpop.f32.mrb[0].mxu0
        %v584 = vadd.f32 0.0, %v583
        %v585 = vpop.f32.mrb[0].mxu0
        %v586 = vadd.f32 0.0, %v585
        %v587 = vpop.f32.mrb[0].mxu0
        %v588 = vadd.f32 0.0, %v587
        %589 = vmatprep.mubr.bf16.mxu0 0
        %590 = vmatmul.mubr.bf16.gmra.mrb[0].mxu0 %v436
        %v591 = vpop.f32.mrb[0].mxu0
        %v592 = vadd.f32 0.0, %v591
        %v593 = vpop.f32.mrb[0].mxu0
        %v594 = vadd.f32 0.0, %v593
        %v595 = vpop.f32.mrb[0].mxu0
        %v596 = vadd.f32 0.0, %v595
        %v597 = vpop.f32.mrb[0].mxu0
        %v598 = vadd.f32 0.0, %v597
        %599 = vmatprep.mubr.bf16.mxu0 0
        %600 = vmatmul.mubr.bf16.gmra.mrb[0].mxu0 %v437
        %v601 = vpop.f32.mrb[0].mxu0
        %v602 = vadd.f32 0.0, %v601
        %v603 = vpop.f32.mrb[0].mxu0
        %v604 = vadd.f32 0.0, %v603
        %v605 = vpop.f32.mrb[0].mxu0
        %v606 = vadd.f32 0.0, %v605
        %v607 = vpop.f32.mrb[0].mxu0
        %v608 = vadd.f32 0.0, %v607
        %609 = vmatprep.mubr.bf16.mxu0 0
        %610 = vmatmul.mubr.bf16.gmra.mrb[0].mxu0 %v438
        %v611 = vpop.f32.mrb[0].mxu0
        %v612 = vadd.f32 0.0, %v611
        %v613 = vpop.f32.mrb[0].mxu0
        %v614 = vadd.f32 0.0, %v613
        %v615 = vpop.f32.mrb[0].mxu0
        %v616 = vadd.f32 0.0, %v615
        %v617 = vpop.f32.mrb[0].mxu0
        %v618 = vadd.f32 0.0, %v617
        %619 = vmatprep.mubr.bf16.mxu0 0
        %620 = vmatmul.mubr.bf16.gmra.mrb[0].mxu0 %v439
        %v621 = vpop.f32.mrb[0].mxu0
        %v622 = vadd.f32 0.0, %v621
        %v623 = vpop.f32.mrb[0].mxu0
        %v624 = vadd.f32 0.0, %v623
        %v625 = vpop.f32.mrb[0].mxu0
        %v626 = vadd.f32 0.0, %v625
        %v627 = vpop.f32.mrb[0].mxu0
        %v628 = vadd.f32 0.0, %v627
        %629 = vmatprep.mubr.bf16.mxu0 0
        %630 = vmatmul.mubr.bf16.gmra.mrb[0].mxu0 %v440
        %v631 = vpop.f32.mrb[0].mxu0
        %v632 = vadd.f32 0.0, %v631
        %v633 = vpop.f32.mrb[0].mxu0
        %v634 = vadd.f32 0.0, %v633
        %v635 = vpop.f32.mrb[0].mxu0
        %v636 = vadd.f32 0.0, %v635
        %v637 = vpop.f32.mrb[0].mxu0
        %v638 = vadd.f32 0.0, %v637
        %639 = vmatprep.mubr.bf16.mxu0 0
        %640 = vmatmul.mubr.bf16.gmra.mrb[0].mxu0 %v441
        %v641 = vpop.f32.mrb[0].mxu0
        %v642 = vadd.f32 0.0, %v641
        %v643 = vpop.f32.mrb[0].mxu0
        %v644 = vadd.f32 0.0, %v643
        %v645 = vpop.f32.mrb[0].mxu0
        %v646 = vadd.f32 0.0, %v645
        %v647 = vpop.f32.mrb[0].mxu0
        %v648 = vadd.f32 0.0, %v647
        %649 = vmatprep.mubr.bf16.mxu0 0
        %650 = vmatmul.mubr.bf16.gmra.mrb[0].mxu0 %v442
        %v651 = vpop.f32.mrb[0].mxu0
        %v652 = vadd.f32 0.0, %v651
        %v653 = vpop.f32.mrb[0].mxu0
        %v654 = vadd.f32 0.0, %v653
        %v655 = vpop.f32.mrb[0].mxu0
        %v656 = vadd.f32 0.0, %v655
        %v657 = vpop.f32.mrb[0].mxu0
        %v658 = vadd.f32 0.0, %v657
        %659 = vdwg.mxu0
        %v660 = vpack.c.bf16 %v586, %v582
        %v661 = vpack.c.bf16 %v588, %v584
        %v662 = vpack.c.bf16 %v596, %v592
        %v663 = vpack.c.bf16 %v598, %v594
        %v664 = vpack.c.bf16 %v606, %v602
        %v665 = vpack.c.bf16 %v608, %v604
        %v666 = vpack.c.bf16 %v616, %v612
        %v667 = vpack.c.bf16 %v618, %v614
        %v668 = vpack.c.bf16 %v626, %v622
        %v669 = vpack.c.bf16 %v628, %v624
        %v670 = vpack.c.bf16 %v636, %v632
        %v671 = vpack.c.bf16 %v638, %v634
        %v672 = vpack.c.bf16 %v646, %v642
        %v673 = vpack.c.bf16 %v648, %v644
        %v674 = vpack.c.bf16 %v656, %v652
        %v675 = vpack.c.bf16 %v658, %v654
        %v692 = vunpack.c.l.b16 %v660
        %v693 = vunpack.c.l.b16 %v661
        %v694 = vunpack.c.h.b16 %v660
        %v695 = vunpack.c.h.b16 %v661
        %v696 = vunpack.c.l.b16 %v662
        %v697 = vunpack.c.l.b16 %v663
        %v698 = vunpack.c.h.b16 %v662
        %v699 = vunpack.c.h.b16 %v663
        %v700 = vunpack.c.l.b16 %v664
        %v701 = vunpack.c.l.b16 %v665
        %v702 = vunpack.c.h.b16 %v664
        %v703 = vunpack.c.h.b16 %v665
        %v704 = vunpack.c.l.b16 %v666
        %v705 = vunpack.c.l.b16 %v667
        %v706 = vunpack.c.h.b16 %v666
        %v707 = vunpack.c.h.b16 %v667
        %v708 = vunpack.c.l.b16 %v668
        %v709 = vunpack.c.l.b16 %v669
        %v710 = vunpack.c.h.b16 %v668
        %v711 = vunpack.c.h.b16 %v669
        %v712 = vunpack.c.l.b16 %v670
        %v713 = vunpack.c.l.b16 %v671
        %v714 = vunpack.c.h.b16 %v670
        %v715 = vunpack.c.h.b16 %v671
        %v716 = vunpack.c.l.b16 %v672
        %v717 = vunpack.c.l.b16 %v673
        %v718 = vunpack.c.h.b16 %v672
        %v719 = vunpack.c.h.b16 %v673
        %v720 = vunpack.c.l.b16 %v674
        %v721 = vunpack.c.l.b16 %v675
        %v722 = vunpack.c.h.b16 %v674
        %v723 = vunpack.c.h.b16 %v675
        %v724 = vpack.c.b16 %v693, %v692
        %v725 = vpack.c.b16 %v695, %v694
        %v726 = vpack.c.b16 %v697, %v696
        %v727 = vpack.c.b16 %v699, %v698
        %v728 = vpack.c.b16 %v701, %v700
        %v729 = vpack.c.b16 %v703, %v702
        %v730 = vpack.c.b16 %v705, %v704
        %v731 = vpack.c.b16 %v707, %v706
        %v732 = vpack.c.b16 %v709, %v708
        %v733 = vpack.c.b16 %v711, %v710
        %v734 = vpack.c.b16 %v713, %v712
        %v735 = vpack.c.b16 %v715, %v714
        %v736 = vpack.c.b16 %v717, %v716
        %v737 = vpack.c.b16 %v719, %v718
        %v738 = vpack.c.b16 %v721, %v720
        %v739 = vpack.c.b16 %v723, %v722
        %756 = vst [vmem:[%s270] sm:$0xff] %v724
        %757 = vst [vmem:[%s270 + $0x8] sm:$0xff] %v725
        %758 = vst [vmem:[%s270 + $0x10] sm:$0xff] %v726
        %759 = vst [vmem:[%s270 + $0x18] sm:$0xff] %v727
        %760 = vst [vmem:[%s270 + $0x20] sm:$0xff] %v728
        %761 = vst [vmem:[%s270 + $0x28] sm:$0xff] %v729
        %762 = vst [vmem:[%s270 + $0x30] sm:$0xff] %v730
        %763 = vst [vmem:[%s270 + $0x38] sm:$0xff] %v731
        %764 = vst [vmem:[%s270 + $0x40] sm:$0xff] %v732
        %765 = vst [vmem:[%s270 + $0x48] sm:$0xff] %v733
        %766 = vst [vmem:[%s270 + $0x50] sm:$0xff] %v734
        %767 = vst [vmem:[%s270 + $0x58] sm:$0xff] %v735
        %768 = vst [vmem:[%s270 + $0x60] sm:$0xff] %v736
        %769 = vst [vmem:[%s270 + $0x68] sm:$0xff] %v737
        %770 = vst [vmem:[%s270 + $0x70] sm:$0xff] %v738
        %771 = vst [vmem:[%s270 + $0x78] sm:$0xff] %v739
        %v772 = vld [vmem:[%s305] sm:$0xff]
        %v773 = vld [vmem:[%s305 + $0x8] sm:$0xff]
        %v774 = vld [vmem:[%s305 + $0x10] sm:$0xff]
        %v775 = vld [vmem:[%s305 + $0x18] sm:$0xff]
        %v776 = vld [vmem:[%s305 + $0x20] sm:$0xff]
        %v777 = vld [vmem:[%s305 + $0x28] sm:$0xff]
        %v778 = vld [vmem:[%s305 + $0x30] sm:$0xff]
        %v779 = vld [vmem:[%s305 + $0x38] sm:$0xff]
        %v780 = vld [vmem:[%s305 + $0x40] sm:$0xff]
        %v781 = vld [vmem:[%s305 + $0x48] sm:$0xff]
        %v782 = vld [vmem:[%s305 + $0x50] sm:$0xff]
        %v783 = vld [vmem:[%s305 + $0x58] sm:$0xff]
        %v784 = vld [vmem:[%s305 + $0x60] sm:$0xff]
        %v785 = vld [vmem:[%s305 + $0x68] sm:$0xff]
        %v786 = vld [vmem:[%s305 + $0x70] sm:$0xff]
        %v787 = vld [vmem:[%s305 + $0x78] sm:$0xff]
        %v788 = vadd.f32 %v582, %v584
        %789 = vadd.xlane.f32.xlu0 %v788
        %v790 = vpop.xlane.xlu0 %789
        %v791 = vadd.f32 %v586, %v588
        %792 = vadd.xlane.f32.xlu0 %v791
        %v793 = vpop.xlane.xlu0 %792
        %v794 = vadd.f32 %v592, %v594
        %795 = vadd.xlane.f32.xlu0 %v794
        %v796 = vpop.xlane.xlu0 %795
        %v797 = vadd.f32 %v596, %v598
        %798 = vadd.xlane.f32.xlu0 %v797
        %v799 = vpop.xlane.xlu0 %798
        %v800 = vadd.f32 %v602, %v604
        %801 = vadd.xlane.f32.xlu0 %v800
        %v802 = vpop.xlane.xlu0 %801
        %v803 = vadd.f32 %v606, %v608
        %804 = vadd.xlane.f32.xlu0 %v803
        %v805 = vpop.xlane.xlu0 %804
        %v806 = vadd.f32 %v612, %v614
        %807 = vadd.xlane.f32.xlu0 %v806
        %v808 = vpop.xlane.xlu0 %807
        %v809 = vadd.f32 %v616, %v618
        %810 = vadd.xlane.f32.xlu0 %v809
        %v811 = vpop.xlane.xlu0 %810
        %v812 = vadd.f32 %v622, %v624
        %813 = vadd.xlane.f32.xlu0 %v812
        %v814 = vpop.xlane.xlu0 %813
        %v815 = vadd.f32 %v626, %v628
        %816 = vadd.xlane.f32.xlu0 %v815
        %v817 = vpop.xlane.xlu0 %816
        %v818 = vadd.f32 %v632, %v634
        %819 = vadd.xlane.f32.xlu0 %v818
        %v820 = vpop.xlane.xlu0 %819
        %v821 = vadd.f32 %v636, %v638
        %822 = vadd.xlane.f32.xlu0 %v821
        %v823 = vpop.xlane.xlu0 %822
        %v824 = vadd.f32 %v642, %v644
        %825 = vadd.xlane.f32.xlu0 %v824
        %v826 = vpop.xlane.xlu0 %825
        %v827 = vadd.f32 %v646, %v648
        %828 = vadd.xlane.f32.xlu0 %v827
        %v829 = vpop.xlane.xlu0 %828
        %v830 = vadd.f32 %v652, %v654
        %831 = vadd.xlane.f32.xlu0 %v830
        %v832 = vpop.xlane.xlu0 %831
        %v833 = vadd.f32 %v656, %v658
        %834 = vadd.xlane.f32.xlu0 %v833
        %v835 = vpop.xlane.xlu0 %834
        %v836 = vadd.f32 %v772, %v790
        %v837 = vadd.f32 %v773, %v793
        %v838 = vadd.f32 %v774, %v796
        %v839 = vadd.f32 %v775, %v799
        %v840 = vadd.f32 %v776, %v802
        %v841 = vadd.f32 %v777, %v805
        %v842 = vadd.f32 %v778, %v808
        %v843 = vadd.f32 %v779, %v811
        %v844 = vadd.f32 %v780, %v814
        %v845 = vadd.f32 %v781, %v817
        %v846 = vadd.f32 %v782, %v820
        %v847 = vadd.f32 %v783, %v823
        %v848 = vadd.f32 %v784, %v826
        %v849 = vadd.f32 %v785, %v829
        %v850 = vadd.f32 %v786, %v832
        %v851 = vadd.f32 %v787, %v835
        %vm852 = vcmask 7168
        %853 = vst.msk [vmem:[%s305] sm:$0xff] %vm852, %v836
        %854 = vst.msk [vmem:[%s305 + $0x8] sm:$0xff] %vm852, %v837
        %855 = vst.msk [vmem:[%s305 + $0x10] sm:$0xff] %vm852, %v838
        %856 = vst.msk [vmem:[%s305 + $0x18] sm:$0xff] %vm852, %v839
        %857 = vst.msk [vmem:[%s305 + $0x20] sm:$0xff] %vm852, %v840
        %858 = vst.msk [vmem:[%s305 + $0x28] sm:$0xff] %vm852, %v841
        %859 = vst.msk [vmem:[%s305 + $0x30] sm:$0xff] %vm852, %v842
        %860 = vst.msk [vmem:[%s305 + $0x38] sm:$0xff] %vm852, %v843
        %861 = vst.msk [vmem:[%s305 + $0x40] sm:$0xff] %vm852, %v844
        %862 = vst.msk [vmem:[%s305 + $0x48] sm:$0xff] %vm852, %v845
        %863 = vst.msk [vmem:[%s305 + $0x50] sm:$0xff] %vm852, %v846
        %864 = vst.msk [vmem:[%s305 + $0x58] sm:$0xff] %vm852, %v847
        %865 = vst.msk [vmem:[%s305 + $0x60] sm:$0xff] %vm852, %v848
        %866 = vst.msk [vmem:[%s305 + $0x68] sm:$0xff] %vm852, %v849
        %867 = vst.msk [vmem:[%s305 + $0x70] sm:$0xff] %vm852, %v850
        %868 = vst.msk [vmem:[%s305 + $0x78] sm:$0xff] %vm852, %v851
        %v869 = vld [vmem:[%s315] sm:$0xff]
        %v870 = vld [vmem:[%s315 + $0x8] sm:$0xff]
        %v871 = vld [vmem:[%s315 + $0x10] sm:$0xff]
        %v872 = vld [vmem:[%s315 + $0x18] sm:$0xff]
        %v873 = vld [vmem:[%s315 + $0x20] sm:$0xff]
        %v874 = vld [vmem:[%s315 + $0x28] sm:$0xff]
        %v875 = vld [vmem:[%s315 + $0x30] sm:$0xff]
        %v876 = vld [vmem:[%s315 + $0x38] sm:$0xff]
        %v877 = vld [vmem:[%s315 + $0x40] sm:$0xff]
        %v878 = vld [vmem:[%s315 + $0x48] sm:$0xff]
        %v879 = vld [vmem:[%s315 + $0x50] sm:$0xff]
        %v880 = vld [vmem:[%s315 + $0x58] sm:$0xff]
        %v881 = vld [vmem:[%s315 + $0x60] sm:$0xff]
        %v882 = vld [vmem:[%s315 + $0x68] sm:$0xff]
        %v883 = vld [vmem:[%s315 + $0x70] sm:$0xff]
        %v884 = vld [vmem:[%s315 + $0x78] sm:$0xff]
        %v885 = vmul.f32 %v582, %v582
        %v886 = vmul.f32 %v584, %v584
        %v887 = vmul.f32 %v586, %v586
        %v888 = vmul.f32 %v588, %v588
        %v889 = vmul.f32 %v592, %v592
        %v890 = vmul.f32 %v594, %v594
        %v891 = vmul.f32 %v596, %v596
        %v892 = vmul.f32 %v598, %v598
        %v893 = vmul.f32 %v602, %v602
        %v894 = vmul.f32 %v604, %v604
        %v895 = vmul.f32 %v606, %v606
        %v896 = vmul.f32 %v608, %v608
        %v897 = vmul.f32 %v612, %v612
        %v898 = vmul.f32 %v614, %v614
        %v899 = vmul.f32 %v616, %v616
        %v900 = vmul.f32 %v618, %v618
        %v901 = vmul.f32 %v622, %v622
        %v902 = vmul.f32 %v624, %v624
        %v903 = vmul.f32 %v626, %v626
        %v904 = vmul.f32 %v628, %v628
        %v905 = vmul.f32 %v632, %v632
        %v906 = vmul.f32 %v634, %v634
        %v907 = vmul.f32 %v636, %v636
        %v908 = vmul.f32 %v638, %v638
        %v909 = vmul.f32 %v642, %v642
        %v910 = vmul.f32 %v644, %v644
        %v911 = vmul.f32 %v646, %v646
        %v912 = vmul.f32 %v648, %v648
        %v913 = vmul.f32 %v652, %v652
        %v914 = vmul.f32 %v654, %v654
        %v915 = vmul.f32 %v656, %v656
        %v916 = vmul.f32 %v658, %v658
        %v917 = vadd.f32 %v885, %v886
        %918 = vadd.xlane.f32.xlu0 %v917
        %v919 = vpop.xlane.xlu0 %918
        %v920 = vadd.f32 %v887, %v888
        %921 = vadd.xlane.f32.xlu0 %v920
        %v922 = vpop.xlane.xlu0 %921
        %v923 = vadd.f32 %v889, %v890
        %924 = vadd.xlane.f32.xlu0 %v923
        %v925 = vpop.xlane.xlu0 %924
        %v926 = vadd.f32 %v891, %v892
        %927 = vadd.xlane.f32.xlu0 %v926
        %v928 = vpop.xlane.xlu0 %927
        %v929 = vadd.f32 %v893, %v894
        %930 = vadd.xlane.f32.xlu0 %v929
        %v931 = vpop.xlane.xlu0 %930
        %v932 = vadd.f32 %v895, %v896
        %933 = vadd.xlane.f32.xlu0 %v932
        %v934 = vpop.xlane.xlu0 %933
        %v935 = vadd.f32 %v897, %v898
        %936 = vadd.xlane.f32.xlu0 %v935
        %v937 = vpop.xlane.xlu0 %936
        %v938 = vadd.f32 %v899, %v900
        %939 = vadd.xlane.f32.xlu0 %v938
        %v940 = vpop.xlane.xlu0 %939
        %v941 = vadd.f32 %v901, %v902
        %942 = vadd.xlane.f32.xlu0 %v941
        %v943 = vpop.xlane.xlu0 %942
        %v944 = vadd.f32 %v903, %v904
        %945 = vadd.xlane.f32.xlu0 %v944
        %v946 = vpop.xlane.xlu0 %945
        %v947 = vadd.f32 %v905, %v906
        %948 = vadd.xlane.f32.xlu0 %v947
        %v949 = vpop.xlane.xlu0 %948
        %v950 = vadd.f32 %v907, %v908
        %951 = vadd.xlane.f32.xlu0 %v950
        %v952 = vpop.xlane.xlu0 %951
        %v953 = vadd.f32 %v909, %v910
        %954 = vadd.xlane.f32.xlu0 %v953
        %v955 = vpop.xlane.xlu0 %954
        %v956 = vadd.f32 %v911, %v912
        %957 = vadd.xlane.f32.xlu0 %v956
        %v958 = vpop.xlane.xlu0 %957
        %v959 = vadd.f32 %v913, %v914
        %960 = vadd.xlane.f32.xlu0 %v959
        %v961 = vpop.xlane.xlu0 %960
        %v962 = vadd.f32 %v915, %v916
        %963 = vadd.xlane.f32.xlu0 %v962
        %v964 = vpop.xlane.xlu0 %963
        %v965 = vadd.f32 %v869, %v919
        %v966 = vadd.f32 %v870, %v922
        %v967 = vadd.f32 %v871, %v925
        %v968 = vadd.f32 %v872, %v928
        %v969 = vadd.f32 %v873, %v931
        %v970 = vadd.f32 %v874, %v934
        %v971 = vadd.f32 %v875, %v937
        %v972 = vadd.f32 %v876, %v940
        %v973 = vadd.f32 %v877, %v943
        %v974 = vadd.f32 %v878, %v946
        %v975 = vadd.f32 %v879, %v949
        %v976 = vadd.f32 %v880, %v952
        %v977 = vadd.f32 %v881, %v955
        %v978 = vadd.f32 %v882, %v958
        %v979 = vadd.f32 %v883, %v961
        %v980 = vadd.f32 %v884, %v964
        %981 = vst.msk [vmem:[%s315] sm:$0xff] %vm852, %v965
        %982 = vst.msk [vmem:[%s315 + $0x8] sm:$0xff] %vm852, %v966
        %983 = vst.msk [vmem:[%s315 + $0x10] sm:$0xff] %vm852, %v967
        %984 = vst.msk [vmem:[%s315 + $0x18] sm:$0xff] %vm852, %v968
        %985 = vst.msk [vmem:[%s315 + $0x20] sm:$0xff] %vm852, %v969
        %986 = vst.msk [vmem:[%s315 + $0x28] sm:$0xff] %vm852, %v970
        %987 = vst.msk [vmem:[%s315 + $0x30] sm:$0xff] %vm852, %v971
        %988 = vst.msk [vmem:[%s315 + $0x38] sm:$0xff] %vm852, %v972
        %989 = vst.msk [vmem:[%s315 + $0x40] sm:$0xff] %vm852, %v973
        %990 = vst.msk [vmem:[%s315 + $0x48] sm:$0xff] %vm852, %v974
        %991 = vst.msk [vmem:[%s315 + $0x50] sm:$0xff] %vm852, %v975
        %992 = vst.msk [vmem:[%s315 + $0x58] sm:$0xff] %vm852, %v976
        %993 = vst.msk [vmem:[%s315 + $0x60] sm:$0xff] %vm852, %v977
        %994 = vst.msk [vmem:[%s315 + $0x68] sm:$0xff] %vm852, %v978
        %995 = vst.msk [vmem:[%s315 + $0x70] sm:$0xff] %vm852, %v979
        %996 = vst.msk [vmem:[%s315 + $0x78] sm:$0xff] %vm852, %v980
        %s997 = sand.u32 %s108, 1
        %s998 = scalar_lea.sflag [#allocation4], %s997
        %s999 = sand.u32 %s108, 1
        %s1000 = smul.addr %s999, 128
        %s1001 = scalar_lea.vmem [#allocation7], %s1000
        %s1002 = smul.u32 16, %s29
        %p1003 = scmp.lt.s32.totalorder %s28, 1
        %s1004 = scalar_select %p1003, %s28, 1
        %p1005 = scmp.lt.s32.totalorder %s1002, 15
        %s1006 = scalar_select %p1005, %s1002, 15
        %s1007 = smul.addr %s1004, 16
        %s1008 = sadd.s32 %s1006, %s1007
        %s1009 = smul.addr %s1008, 8
        %s1010 = scalar_lea.vmem %s3, %s1009
        %s1011 = smul.u32 16, %s29
        %p1012 = scmp.lt.s32.totalorder %s28, 1
        %s1013 = scalar_select %p1012, %s28, 1
        %p1014 = scmp.lt.s32.totalorder %s1011, 15
        %s1015 = scalar_select %p1014, %s1011, 15
        %s1016 = smul.addr %s1013, 16
        %s1017 = sadd.s32 %s1015, %s1016
        %s1018 = smul.addr %s1017, 8
        %s1019 = scalar_lea.vmem %s4, %s1018
        // Predicated region
        $region41: #{tpu_custom_call.1} parent=27 // pred_check
          %p1020 = pneg %p118
        $region42: #{tpu_custom_call.1} parent=27 // pred_check_branch
          %1022 = sbr.rel (%p1020) target = $region44
        $region43: #{tpu_custom_call.1} parent=27 // pred_region
          %s1023 = smul.u32 16, %s29
          %s1024 = smul.u32 2, %s30
          %s1026 = ssub.s32 2048, 2048
          %1027 = vsyncadd %s998, %s1026
          %s1028 = smul.addr %s1023, 2
          %s1029 = sadd.s32 %s1024, %s1028
          %s1030 = smul.addr %s28, 32
          %s1031 = sadd.s32 %s1029, %s1030
          %s1032 = smul.addr %s1031, 64
          %s1033 = scalar_lea.hbm %s2, %s1032
          %s1034 = sshll.u32 %s1001, 4
          %s1035 = int_to_ptr.vmem [resolvable:$true] %s1034
          %1040 = dma.vmem_to_hbm [thread:$0]  %s1035, 2048, %s1033, %s998, 128, 128, 8
        $region44: #{tpu_custom_call.1} parent=27 // pred_fallthru
          _
        // Predicated region
        $region45: #{tpu_custom_call.1} parent=27 // pred_check
          %p1041 = pneg %p146
        $region46: #{tpu_custom_call.1} parent=27 // pred_check_branch
          %1043 = sbr.rel (%p1041) target = $region48
        $region47: #{tpu_custom_call.1} parent=27 // pred_region
          %s1044 = smul.u32 16, %s29
        $region48: #{tpu_custom_call.1} parent=27 // pred_fallthru
          _
        // Predicated region
        $region49: #{tpu_custom_call.1} parent=27 // pred_check
          %p1045 = pneg %p174
        $region50: #{tpu_custom_call.1} parent=27 // pred_check_branch
          %1047 = sbr.rel (%p1045) target = $region52
        $region51: #{tpu_custom_call.1} parent=27 // pred_region
          %s1048 = smul.u32 16, %s29
        $region52: #{tpu_custom_call.1} parent=27 // pred_fallthru
          _
      $region28: #{tpu_custom_call.1} parent=5 // pred_fallthru
        _
      %p1049 = scmp.le.s32.totalorder 2, %s18
      // Predicated region
      $region53: #{tpu_custom_call.1} parent=5 // pred_check
        %p1050 = pneg %p1049
      $region54: #{tpu_custom_call.1} parent=5 // pred_check_branch
        %1052 = sbr.rel (%p1050) target = $region56
      $region55: #{tpu_custom_call.1} parent=5 // pred_region
        %s1053 = ssub.s32 %s18, 2
        // Predicated region
        $region57: #{tpu_custom_call.1} parent=55 // pred_check
          %p1054 = pneg %p124
        $region58: #{tpu_custom_call.1} parent=55 // pred_check_branch
          %1056 = sbr.rel (%p1054) target = $region60
        $region59: #{tpu_custom_call.1} parent=55 // pred_region
          %s1057 = sand.u32 %s109, 1
          %s1058 = scalar_lea.sflag [#allocation4], %s1057
          %s1059 = sand.u32 %s109, 1
          %s1060 = smul.addr %s1059, 128
          %s1061 = scalar_lea.vmem [#allocation7], %s1060
          %1062 = dma.done %s1058, 2048
        $region60: #{tpu_custom_call.1} parent=55 // pred_fallthru
          _
        // Predicated region
        $region61: #{tpu_custom_call.1} parent=55 // pred_check
          %p1063 = pneg %p152
        $region62: #{tpu_custom_call.1} parent=55 // pred_check_branch
          %1065 = sbr.rel (%p1063) target = $region64
        $region63: #{tpu_custom_call.1} parent=55 // pred_region
          %s1066 = smul.u32 16, %s32
          %p1067 = scmp.lt.s32.totalorder %s31, 1
          %s1068 = scalar_select %p1067, %s31, 1
          %p1069 = scmp.lt.s32.totalorder %s1066, 15
          %s1070 = scalar_select %p1069, %s1066, 15
          %s1071 = smul.addr %s1068, 16
          %s1072 = sadd.s32 %s1070, %s1071
          %s1073 = smul.addr %s1072, 8
          %s1074 = scalar_lea.vmem %s3, %s1073
        $region64: #{tpu_custom_call.1} parent=55 // pred_fallthru
          _
        // Predicated region
        $region65: #{tpu_custom_call.1} parent=55 // pred_check
          %p1075 = pneg %p180
        $region66: #{tpu_custom_call.1} parent=55 // pred_check_branch
          %1077 = sbr.rel (%p1075) target = $region68
        $region67: #{tpu_custom_call.1} parent=55 // pred_region
          %s1078 = smul.u32 16, %s32
          %p1079 = scmp.lt.s32.totalorder %s31, 1
          %s1080 = scalar_select %p1079, %s31, 1
          %p1081 = scmp.lt.s32.totalorder %s1078, 15
          %s1082 = scalar_select %p1081, %s1078, 15
          %s1083 = smul.addr %s1080, 16
          %s1084 = sadd.s32 %s1082, %s1083
          %s1085 = smul.addr %s1084, 8
          %s1086 = scalar_lea.vmem %s4, %s1085
        $region68: #{tpu_custom_call.1} parent=55 // pred_fallthru
          _
      $region56: #{tpu_custom_call.1} parent=5 // pred_fallthru
        _
    $region6: #{tpu_custom_call.1} parent=1 // loop_footer
      %s22 = sadd.s32 1, %s18
    $region7: #{tpu_custom_call.1} parent=1 // loop_footer_branch
      %17 = sbr.rel target = $region3
    $region8: #{tpu_custom_call.1} parent=1 // loop_exit
      _
    %1087 = vsyncpa [#allocation3], 1
    %s1088 = scalar_lea.sflag [#allocation3], 1
    %1089 = vsyncpa %s1088, 1
    %1090 = vsyncpa [#allocation6], 1
    %1091 = vsyncpa [#allocation4], 1
    %s1092 = scalar_lea.sflag [#allocation4], 1
    %1093 = vsyncpa %s1092, 1

</llo_original>
